<compile_context>
chip_gen: v7x
topology: tpu7x:2x2x1
jax: 0.10.0
libtpu: 0.0.40
codegen_flags: <defaults>
</compile_context>

<pallas_src>
import math
from functools import lru_cache

import numpy as np
import jax
import jax.numpy as jnp
from jax.experimental import pallas as pl
from jax.experimental.pallas import tpu as pltpu

NEG_SLOPE = 0.01  # PyTorch nn.LeakyReLU default

_VMEM_TILE_BUDGET = 40 * 1024 * 1024   # per-step working-set budget (safe on v7x 64 MiB/TC)
_VMEM_LIMIT_BYTES = 48 * 1024 * 1024   # scoped-VMEM limit handed to Mosaic


def _round_up(x, m):
    return ((x + m - 1) // m) * m


def _vmem_estimate_bytes(B, Cin, CIN_PAD, Cout, KK, HW):
    """Rough per-grid-step VMEM footprint (double-buffered I/O + scratch)."""
    bhw = B * HW
    in_buf = 2 * B * Cin * HW * 4
    out_buf = 2 * B * Cout * HW * 4
    mask_buf = 2 * _round_up(KK, 8) * bhw * 4
    w_buf = 2 * _round_up(Cout, 8) * _round_up(KK * CIN_PAD, 128) * 4
    col = KK * CIN_PAD * bhw * 4
    xpad = CIN_PAD * bhw * 4
    return in_buf + out_buf + mask_buf + w_buf + col + xpad


def _choose_batch_tile(N, Cin, CIN_PAD, Cout, KK, HW):
    """Largest divisor B of N that (a) fits the per-step VMEM budget and
    (b) keeps >= 2 grid steps when N >= 2 (so both v7x TensorCores get work)."""
    best = 1
    for B in range(1, N + 1):
        if N % B:
            continue
        if N >= 2 and N // B < 2:
            continue
        if _vmem_estimate_bytes(B, Cin, CIN_PAD, Cout, KK, HW) > _VMEM_TILE_BUDGET:
            continue
        best = max(best, B)
    return best


@lru_cache(maxsize=None)
def _tap_masks_np(H, W, K, pad, B):
    """0/1 validity mask per tap, tiled B times along the flattened spatial axis."""
    hh = np.arange(H).reshape(H, 1)
    ww = np.arange(W).reshape(1, W)
    masks = []
    for kh in range(K):
        for kw in range(K):
            dh, dw = kh - pad, kw - pad
            m = (hh + dh >= 0) & (hh + dh < H) & (ww + dw >= 0) & (ww + dw < W)
            masks.append(m.reshape(-1).astype(np.float32))
    per_image = np.stack(masks, 0)              # (K*K, H*W)
    return np.tile(per_image, (1, B))           # (K*K, B*H*W)


def _make_conv_lrelu_kernel(H, W, K, pad, Cin, CIN_PAD, Cout, B):
    HW = H * W
    BHW = B * HW
    KK = K * K

    def kernel(x_ref, w_ref, b_ref, mask_ref, o_ref, xpad_ref, col_ref):
        # x_ref    : (B, Cin, HW)        B images; channels on sublanes, flat spatial on lanes
        # w_ref    : (Cout, KK*CIN_PAD)  packed weights (zeros in padded-Cin slots)
        # b_ref    : (Cout, 1)
        # mask_ref : (KK, B*HW)          0/1 validity mask per tap (tiled over the B images)
        # o_ref    : (B, Cout, HW)
        # xpad_ref : (CIN_PAD, B*HW)     sublane-padded, lane-concatenated copy of the images
        # col_ref  : (KK*CIN_PAD, B*HW)  im2col scratch in VMEM

        # Padded-Cin rows must be exactly zero (their weights are zero, but
        # 0 * uninitialized-NaN would still poison the matmul).  Zeroed every
        # step so it stays correct however the "parallel" axis is split across
        # TensorCores (cheap: (CIN_PAD-Cin) rows only).
        if CIN_PAD != Cin:
            xpad_ref[Cin:CIN_PAD, :] = jnp.zeros((CIN_PAD - Cin, BHW), jnp.float32)

        # Lane-concatenate the B images into one (CIN_PAD, B*HW) slab.
        for b in range(B):
            xpad_ref[0:Cin, b * HW:(b + 1) * HW] = x_ref[b]

        xp = xpad_ref[...]

        # im2col: one lane-rotated, boundary-masked copy of the slab per tap.
        # The roll covers all B images at once; cross-image / wrap-around bleed
        # only hits positions the tap mask zeroes (holds for stride=1 'same' conv).
        for kh in range(K):
            for kw in range(K):
                t = kh * K + kw
                dh, dw = kh - pad, kw - pad
                shift = dh * W + dw
                amt = (-shift) % BHW
                shifted = pltpu.roll(xp, amt, axis=1) if amt else xp
                if dh != 0 or dw != 0:
                    m = mask_ref[t:t + 1, :]                   # (1, BHW)
                    shifted = jnp.where(m != 0, shifted, 0.0)  # NaN/Inf-safe masking
                # Full 8-sublane aligned block store (padded rows already zero).
                col_ref[t * CIN_PAD:(t + 1) * CIN_PAD, :] = shifted

        # Single fused MXU contraction over all taps and input channels.
        acc = jnp.dot(w_ref[...], col_ref[...], preferred_element_type=jnp.float32)
        acc = acc + b_ref[...]                                  # bias broadcast over lanes
        acc = jnp.where(acc >= 0, acc, NEG_SLOPE * acc)         # LeakyReLU
        acc = acc.astype(o_ref.dtype)

        # Split the (Cout, B*HW) result back into per-image (Cout, HW) blocks.
        for b in range(B):
            o_ref[b] = acc[:, b * HW:(b + 1) * HW]

    return kernel


def pack_basic_block_params(weight_oikk, bias):
    """One-time repack of PyTorch-layout conv params (hoisted off the per-call path)."""
    Cout, Cin, K, K2 = weight_oikk.shape
    assert K == K2
    CIN_PAD = _round_up(Cin, 8)                                      # sublane-aligned tap stride
    w = jnp.transpose(weight_oikk, (2, 3, 1, 0))                     # (K, K, Cin, Cout)
    w = jnp.pad(w, ((0, 0), (0, 0), (0, CIN_PAD - Cin), (0, 0)))     # zeros in padded-Cin slots
    w_mat = jnp.transpose(w.reshape(K * K * CIN_PAD, Cout), (1, 0))  # (Cout, K*K*CIN_PAD)
    b_col = jnp.asarray(bias).reshape(Cout, 1)
    return {"w_mat": w_mat, "b_col": b_col, "Cin": Cin, "CIN_PAD": CIN_PAD,
            "Cout": Cout, "K": K}


def basic_block_apply(params, x_nchw, *, stride=1, pad=1):
    """Conv2d(bias=True) + LeakyReLU, matching PyTorch BasicBlock.forward."""
    assert stride == 1, "BasicBlock default uses stride=1"
    N, Cin, H, W = x_nchw.shape
    K, Cout, CIN_PAD = params["K"], params["Cout"], params["CIN_PAD"]
    assert Cin == params["Cin"]
    assert 2 * pad == K - 1, "shift-and-mask kernel implements 'same' convolution"
    HW = H * W
    KK = K * K

    B = _choose_batch_tile(N, Cin, CIN_PAD, Cout, KK, HW)
    BHW = B * HW

    x_flat = x_nchw.reshape(N, Cin, HW)                       # view-only reshape, no transpose
    tap_mask = jnp.asarray(_tap_masks_np(H, W, K, pad, B))    # (KK, B*HW)

    kernel = _make_conv_lrelu_kernel(H, W, K, pad, Cin, CIN_PAD, Cout, B)

    out_flat = pl.pallas_call(
        kernel,
        out_shape=jax.ShapeDtypeStruct((N, Cout, HW), x_nchw.dtype),
        grid_spec=pltpu.PrefetchScalarGridSpec(
            num_scalar_prefetch=0,
            grid=(N // B,),
            in_specs=[
                pl.BlockSpec((B, Cin, HW), lambda n: (n, 0, 0)),
                pl.BlockSpec((Cout, KK * CIN_PAD), lambda n: (0, 0)),
                pl.BlockSpec((Cout, 1), lambda n: (0, 0)),
                pl.BlockSpec((KK, BHW), lambda n: (0, 0)),
            ],
            out_specs=pl.BlockSpec((B, Cout, HW), lambda n: (n, 0, 0)),
            scratch_shapes=[
                pltpu.VMEM((CIN_PAD, BHW), jnp.float32),            # padded image slab
                pltpu.VMEM((KK * CIN_PAD, BHW), jnp.float32),       # im2col
            ],
        ),
        compiler_params=pltpu.CompilerParams(
            dimension_semantics=("parallel",),
            vmem_limit_bytes=_VMEM_LIMIT_BYTES,
        ),
    )(x_flat, params["w_mat"], params["b_col"], tap_mask)

    return out_flat.reshape(N, Cout, H, W)                    # view-only reshape back to NCHW


def basic_block_forward(x_nchw, weight_oikk, bias, *, ksize=3, stride=1, pad=1):
    """Convenience wrapper matching the original signature.  For repeated calls,
    prefer pack_basic_block_params(...) once + basic_block_apply(...)."""
    params = pack_basic_block_params(weight_oikk, bias)
    assert params["K"] == ksize
    return basic_block_apply(params, x_nchw, stride=stride, pad=pad)


def init_basic_block_params(key, in_channels, out_channels, ksize=3):
    """Deterministic init mirroring BasicBlock.__init__:
       weight ~ xavier_normal_, bias ~ PyTorch Conv2d default uniform."""
    kw, kb = jax.random.split(key)
    fan_in = in_channels * ksize * ksize
    fan_out = out_channels * ksize * ksize
    xavier_std = math.sqrt(2.0 / (fan_in + fan_out))
    weight = xavier_std * jax.random.normal(
        kw, (out_channels, in_channels, ksize, ksize), dtype=jnp.float32
    )
    bound = 1.0 / math.sqrt(fan_in)
    bias = jax.random.uniform(
        kb, (out_channels,), minval=-bound, maxval=bound, dtype=jnp.float32
    )
    return weight, bias


if __name__ == "__main__":
    key = jax.random.PRNGKey(0)
    k_x, k_p, k_x2 = jax.random.split(key, 3)

    def reference(x, weight, bias):
        Cout = weight.shape[0]
        r = jax.lax.conv_general_dilated(
            x, weight, window_strides=(1, 1), padding=((1, 1), (1, 1)),
            dimension_numbers=("NCHW", "OIHW", "NCHW"),
        ) + bias.reshape(1, Cout, 1, 1)
        return jnp.where(r >= 0, r, NEG_SLOPE * r)

    # Spec-sized case: N=2, Cin=4, H=W=16, Cout=8  (B=1, two grid steps).
    N, Cin, H, W, Cout = 2, 4, 16, 16, 8
    x = jax.random.normal(k_x, (N, Cin, H, W), dtype=jnp.float32)
    weight, bias = init_basic_block_params(k_p, Cin, Cout, ksize=3)
    params = pack_basic_block_params(weight, bias)

    out = jax.block_until_ready(basic_block_apply(params, x, stride=1, pad=1))
    ref = reference(x, weight, bias)
    assert out.shape == (N, Cout, H, W)
    assert jnp.allclose(out, ref, atol=1e-4, rtol=1e-4)

    # Multi-image-per-step case (exercises B>1 lane-concatenated im2col + whole-slab roll).
    N2 = 8
    x2 = jax.random.normal(k_x2, (N2, Cin, H, W), dtype=jnp.float32)
    out2 = jax.block_until_ready(basic_block_apply(params, x2, stride=1, pad=1))
    ref2 = reference(x2, weight, bias)
    assert out2.shape == (N2, Cout, H, W)
    assert jnp.allclose(out2, ref2, atol=1e-4, rtol=1e-4)

    print("KERNEL_OK")
</pallas_src>

<mosaic_0001>
module attributes {stable_mosaic.version = 11 : i64} {
  func.func @kernel(%arg0: i32, %arg1: memref<1x4x256xf32, #tpu.memory_space<vmem>>, %arg2: memref<8x72xf32, #tpu.memory_space<vmem>>, %arg3: memref<8x1xf32, #tpu.memory_space<vmem>>, %arg4: memref<9x256xf32, #tpu.memory_space<vmem>>, %arg5: memref<1x8x256xf32, #tpu.memory_space<vmem>>, %arg6: memref<8x256xf32, #tpu.memory_space<vmem>>, %arg7: memref<72x256xf32, #tpu.memory_space<vmem>>) attributes {dimension_semantics = [#tpu.dimension_semantics<parallel>], iteration_bounds = array<i64: 2>, scalar_prefetch = 0 : i64, scratch_operands = 2 : i64, tpu.core_type = #tpu.core_type<tc>, window_params = [{transform_indices = @transform_0, window_bounds = array<i64: 1, 4, 256>}, {pipeline_mode = #tpu.pipeline_mode<synchronous>, transform_indices = @transform_1, window_bounds = array<i64: 8, 72>}, {pipeline_mode = #tpu.pipeline_mode<synchronous>, transform_indices = @transform_2, window_bounds = array<i64: 8, 1>}, {pipeline_mode = #tpu.pipeline_mode<synchronous>, transform_indices = @transform_3, window_bounds = array<i64: 9, 256>}, {transform_indices = @transform_4, window_bounds = array<i64: 1, 8, 256>}]} {
    %cst = arith.constant 0.000000e+00 : f32
    %0 = vector.broadcast %cst : f32 to vector<4x256xf32>
    %c4 = arith.constant 4 : index
    %c0 = arith.constant 0 : index
    %1 = vector.load %arg6[%c4, %c0] : memref<8x256xf32, #tpu.memory_space<vmem>>, vector<4x256xf32>
    tpu.vector_store %arg6[%c4, %c0], %0 {strides = array<i32>} : memref<8x256xf32, #tpu.memory_space<vmem>>, vector<4x256xf32>,
    %c0_0 = arith.constant 0 : index
    %c0_1 = arith.constant 0 : index
    %c0_2 = arith.constant 0 : index
    %2 = vector.load %arg1[%c0_0, %c0_1, %c0_2] : memref<1x4x256xf32, #tpu.memory_space<vmem>>, vector<1x4x256xf32>
    %3 = vector.shape_cast %2 : vector<1x4x256xf32> to vector<4x256xf32>
    %c0_3 = arith.constant 0 : index
    %c0_4 = arith.constant 0 : index
    %4 = vector.load %arg6[%c0_3, %c0_4] : memref<8x256xf32, #tpu.memory_space<vmem>>, vector<4x256xf32>
    tpu.vector_store %arg6[%c0_3, %c0_4], %3 {strides = array<i32>} : memref<8x256xf32, #tpu.memory_space<vmem>>, vector<4x256xf32>,
    %c0_5 = arith.constant 0 : index
    %c0_6 = arith.constant 0 : index
    %5 = vector.load %arg6[%c0_5, %c0_6] : memref<8x256xf32, #tpu.memory_space<vmem>>, vector<8x256xf32>
    %c17_i32 = arith.constant 17 : i32
    %6 = tpu.dynamic_rotate %5 by %c17_i32 dim 1 : vector<8x256xf32>, i32 -> vector<8x256xf32>
    %c0_7 = arith.constant 0 : index
    %c0_8 = arith.constant 0 : index
    %7 = vector.load %arg4[%c0_7, %c0_8] : memref<9x256xf32, #tpu.memory_space<vmem>>, vector<1x256xf32>
    %cst_9 = arith.constant 0.000000e+00 : f32
    %8 = vector.broadcast %cst_9 : f32 to vector<1x256xf32>
    %9 = arith.cmpf one, %7, %8 : vector<1x256xf32>
    %cst_10 = arith.constant 0.000000e+00 : f32
    %10 = vector.shape_cast %9 : vector<1x256xi1> to vector<1x256xi1>
    %11 = vector.broadcast %10 : vector<1x256xi1> to vector<8x256xi1>
    %12 = vector.broadcast %cst_10 : f32 to vector<8x256xf32>
    %13 = arith.select %11, %6, %12 : vector<8x256xi1>, vector<8x256xf32>
    %c0_11 = arith.constant 0 : index
    %c0_12 = arith.constant 0 : index
    %14 = vector.load %arg7[%c0_11, %c0_12] : memref<72x256xf32, #tpu.memory_space<vmem>>, vector<8x256xf32>
    tpu.vector_store %arg7[%c0_11, %c0_12], %13 {strides = array<i32>} : memref<72x256xf32, #tpu.memory_space<vmem>>, vector<8x256xf32>,
    %c16_i32 = arith.constant 16 : i32
    %15 = tpu.dynamic_rotate %5 by %c16_i32 dim 1 : vector<8x256xf32>, i32 -> vector<8x256xf32>
    %c1 = arith.constant 1 : index
    %c0_13 = arith.constant 0 : index
    %16 = vector.load %arg4[%c1, %c0_13] : memref<9x256xf32, #tpu.memory_space<vmem>>, vector<1x256xf32>
    %cst_14 = arith.constant 0.000000e+00 : f32
    %17 = vector.broadcast %cst_14 : f32 to vector<1x256xf32>
    %18 = arith.cmpf one, %16, %17 : vector<1x256xf32>
    %cst_15 = arith.constant 0.000000e+00 : f32
    %19 = vector.shape_cast %18 : vector<1x256xi1> to vector<1x256xi1>
    %20 = vector.broadcast %19 : vector<1x256xi1> to vector<8x256xi1>
    %21 = vector.broadcast %cst_15 : f32 to vector<8x256xf32>
    %22 = arith.select %20, %15, %21 : vector<8x256xi1>, vector<8x256xf32>
    %c8 = arith.constant 8 : index
    %c0_16 = arith.constant 0 : index
    %23 = vector.load %arg7[%c8, %c0_16] : memref<72x256xf32, #tpu.memory_space<vmem>>, vector<8x256xf32>
    tpu.vector_store %arg7[%c8, %c0_16], %22 {strides = array<i32>} : memref<72x256xf32, #tpu.memory_space<vmem>>, vector<8x256xf32>,
    %c15_i32 = arith.constant 15 : i32
    %24 = tpu.dynamic_rotate %5 by %c15_i32 dim 1 : vector<8x256xf32>, i32 -> vector<8x256xf32>
    %c2 = arith.constant 2 : index
    %c0_17 = arith.constant 0 : index
    %25 = vector.load %arg4[%c2, %c0_17] : memref<9x256xf32, #tpu.memory_space<vmem>>, vector<1x256xf32>
    %cst_18 = arith.constant 0.000000e+00 : f32
    %26 = vector.broadcast %cst_18 : f32 to vector<1x256xf32>
    %27 = arith.cmpf one, %25, %26 : vector<1x256xf32>
    %cst_19 = arith.constant 0.000000e+00 : f32
    %28 = vector.shape_cast %27 : vector<1x256xi1> to vector<1x256xi1>
    %29 = vector.broadcast %28 : vector<1x256xi1> to vector<8x256xi1>
    %30 = vector.broadcast %cst_19 : f32 to vector<8x256xf32>
    %31 = arith.select %29, %24, %30 : vector<8x256xi1>, vector<8x256xf32>
    %c16 = arith.constant 16 : index
    %c0_20 = arith.constant 0 : index
    %32 = vector.load %arg7[%c16, %c0_20] : memref<72x256xf32, #tpu.memory_space<vmem>>, vector<8x256xf32>
    tpu.vector_store %arg7[%c16, %c0_20], %31 {strides = array<i32>} : memref<72x256xf32, #tpu.memory_space<vmem>>, vector<8x256xf32>,
    %c1_i32 = arith.constant 1 : i32
    %33 = tpu.dynamic_rotate %5 by %c1_i32 dim 1 : vector<8x256xf32>, i32 -> vector<8x256xf32>
    %c3 = arith.constant 3 : index
    %c0_21 = arith.constant 0 : index
    %34 = vector.load %arg4[%c3, %c0_21] : memref<9x256xf32, #tpu.memory_space<vmem>>, vector<1x256xf32>
    %cst_22 = arith.constant 0.000000e+00 : f32
    %35 = vector.broadcast %cst_22 : f32 to vector<1x256xf32>
    %36 = arith.cmpf one, %34, %35 : vector<1x256xf32>
    %cst_23 = arith.constant 0.000000e+00 : f32
    %37 = vector.shape_cast %36 : vector<1x256xi1> to vector<1x256xi1>
    %38 = vector.broadcast %37 : vector<1x256xi1> to vector<8x256xi1>
    %39 = vector.broadcast %cst_23 : f32 to vector<8x256xf32>
    %40 = arith.select %38, %33, %39 : vector<8x256xi1>, vector<8x256xf32>
    %c24 = arith.constant 24 : index
    %c0_24 = arith.constant 0 : index
    %41 = vector.load %arg7[%c24, %c0_24] : memref<72x256xf32, #tpu.memory_space<vmem>>, vector<8x256xf32>
    tpu.vector_store %arg7[%c24, %c0_24], %40 {strides = array<i32>} : memref<72x256xf32, #tpu.memory_space<vmem>>, vector<8x256xf32>,
    %c32 = arith.constant 32 : index
    %c0_25 = arith.constant 0 : index
    %42 = vector.load %arg7[%c32, %c0_25] : memref<72x256xf32, #tpu.memory_space<vmem>>, vector<8x256xf32>
    tpu.vector_store %arg7[%c32, %c0_25], %5 {strides = array<i32>} : memref<72x256xf32, #tpu.memory_space<vmem>>, vector<8x256xf32>,
    %c255_i32 = arith.constant 255 : i32
    %43 = tpu.dynamic_rotate %5 by %c255_i32 dim 1 : vector<8x256xf32>, i32 -> vector<8x256xf32>
    %c5 = arith.constant 5 : index
    %c0_26 = arith.constant 0 : index
    %44 = vector.load %arg4[%c5, %c0_26] : memref<9x256xf32, #tpu.memory_space<vmem>>, vector<1x256xf32>
    %cst_27 = arith.constant 0.000000e+00 : f32
    %45 = vector.broadcast %cst_27 : f32 to vector<1x256xf32>
    %46 = arith.cmpf one, %44, %45 : vector<1x256xf32>
    %cst_28 = arith.constant 0.000000e+00 : f32
    %47 = vector.shape_cast %46 : vector<1x256xi1> to vector<1x256xi1>
    %48 = vector.broadcast %47 : vector<1x256xi1> to vector<8x256xi1>
    %49 = vector.broadcast %cst_28 : f32 to vector<8x256xf32>
    %50 = arith.select %48, %43, %49 : vector<8x256xi1>, vector<8x256xf32>
    %c40 = arith.constant 40 : index
    %c0_29 = arith.constant 0 : index
    %51 = vector.load %arg7[%c40, %c0_29] : memref<72x256xf32, #tpu.memory_space<vmem>>, vector<8x256xf32>
    tpu.vector_store %arg7[%c40, %c0_29], %50 {strides = array<i32>} : memref<72x256xf32, #tpu.memory_space<vmem>>, vector<8x256xf32>,
    %c241_i32 = arith.constant 241 : i32
    %52 = tpu.dynamic_rotate %5 by %c241_i32 dim 1 : vector<8x256xf32>, i32 -> vector<8x256xf32>
    %c6 = arith.constant 6 : index
    %c0_30 = arith.constant 0 : index
    %53 = vector.load %arg4[%c6, %c0_30] : memref<9x256xf32, #tpu.memory_space<vmem>>, vector<1x256xf32>
    %cst_31 = arith.constant 0.000000e+00 : f32
    %54 = vector.broadcast %cst_31 : f32 to vector<1x256xf32>
    %55 = arith.cmpf one, %53, %54 : vector<1x256xf32>
    %cst_32 = arith.constant 0.000000e+00 : f32
    %56 = vector.shape_cast %55 : vector<1x256xi1> to vector<1x256xi1>
    %57 = vector.broadcast %56 : vector<1x256xi1> to vector<8x256xi1>
    %58 = vector.broadcast %cst_32 : f32 to vector<8x256xf32>
    %59 = arith.select %57, %52, %58 : vector<8x256xi1>, vector<8x256xf32>
    %c48 = arith.constant 48 : index
    %c0_33 = arith.constant 0 : index
    %60 = vector.load %arg7[%c48, %c0_33] : memref<72x256xf32, #tpu.memory_space<vmem>>, vector<8x256xf32>
    tpu.vector_store %arg7[%c48, %c0_33], %59 {strides = array<i32>} : memref<72x256xf32, #tpu.memory_space<vmem>>, vector<8x256xf32>,
    %c240_i32 = arith.constant 240 : i32
    %61 = tpu.dynamic_rotate %5 by %c240_i32 dim 1 : vector<8x256xf32>, i32 -> vector<8x256xf32>
    %c7 = arith.constant 7 : index
    %c0_34 = arith.constant 0 : index
    %62 = vector.load %arg4[%c7, %c0_34] : memref<9x256xf32, #tpu.memory_space<vmem>>, vector<1x256xf32>
    %cst_35 = arith.constant 0.000000e+00 : f32
    %63 = vector.broadcast %cst_35 : f32 to vector<1x256xf32>
    %64 = arith.cmpf one, %62, %63 : vector<1x256xf32>
    %cst_36 = arith.constant 0.000000e+00 : f32
    %65 = vector.shape_cast %64 : vector<1x256xi1> to vector<1x256xi1>
    %66 = vector.broadcast %65 : vector<1x256xi1> to vector<8x256xi1>
    %67 = vector.broadcast %cst_36 : f32 to vector<8x256xf32>
    %68 = arith.select %66, %61, %67 : vector<8x256xi1>, vector<8x256xf32>
    %c56 = arith.constant 56 : index
    %c0_37 = arith.constant 0 : index
    %69 = vector.load %arg7[%c56, %c0_37] : memref<72x256xf32, #tpu.memory_space<vmem>>, vector<8x256xf32>
    tpu.vector_store %arg7[%c56, %c0_37], %68 {strides = array<i32>} : memref<72x256xf32, #tpu.memory_space<vmem>>, vector<8x256xf32>,
    %c239_i32 = arith.constant 239 : i32
    %70 = tpu.dynamic_rotate %5 by %c239_i32 dim 1 : vector<8x256xf32>, i32 -> vector<8x256xf32>
    %c8_38 = arith.constant 8 : index
    %c0_39 = arith.constant 0 : index
    %71 = vector.load %arg4[%c8_38, %c0_39] : memref<9x256xf32, #tpu.memory_space<vmem>>, vector<1x256xf32>
    %cst_40 = arith.constant 0.000000e+00 : f32
    %72 = vector.broadcast %cst_40 : f32 to vector<1x256xf32>
    %73 = arith.cmpf one, %71, %72 : vector<1x256xf32>
    %cst_41 = arith.constant 0.000000e+00 : f32
    %74 = vector.shape_cast %73 : vector<1x256xi1> to vector<1x256xi1>
    %75 = vector.broadcast %74 : vector<1x256xi1> to vector<8x256xi1>
    %76 = vector.broadcast %cst_41 : f32 to vector<8x256xf32>
    %77 = arith.select %75, %70, %76 : vector<8x256xi1>, vector<8x256xf32>
    %c64 = arith.constant 64 : index
    %c0_42 = arith.constant 0 : index
    %78 = vector.load %arg7[%c64, %c0_42] : memref<72x256xf32, #tpu.memory_space<vmem>>, vector<8x256xf32>
    tpu.vector_store %arg7[%c64, %c0_42], %77 {strides = array<i32>} : memref<72x256xf32, #tpu.memory_space<vmem>>, vector<8x256xf32>,
    %c0_43 = arith.constant 0 : index
    %c0_44 = arith.constant 0 : index
    %79 = vector.load %arg2[%c0_43, %c0_44] : memref<8x72xf32, #tpu.memory_space<vmem>>, vector<8x72xf32>
    %c0_45 = arith.constant 0 : index
    %c0_46 = arith.constant 0 : index
    %80 = vector.load %arg7[%c0_45, %c0_46] : memref<72x256xf32, #tpu.memory_space<vmem>>, vector<72x256xf32>
    %cst_47 = arith.constant dense<0.000000e+00> : vector<8x256xf32>
    %81 = tpu.matmul %79, %80, %cst_47 {dimension_numbers = #tpu.dot_dimension_numbers<[1], [0], [0], [1], [0, 0, 1, 1], [], []>} : vector<8x72xf32>, vector<72x256xf32>, vector<8x256xf32> -> vector<8x256xf32>
    %c0_48 = arith.constant 0 : index
    %c0_49 = arith.constant 0 : index
    %82 = vector.load %arg3[%c0_48, %c0_49] : memref<8x1xf32, #tpu.memory_space<vmem>>, vector<8x1xf32>
    %83 = vector.broadcast %82 : vector<8x1xf32> to vector<8x256xf32>
    %84 = arith.addf %81, %83 : vector<8x256xf32>
    %cst_50 = arith.constant 0.000000e+00 : f32
    %85 = vector.broadcast %cst_50 : f32 to vector<8x256xf32>
    %86 = arith.cmpf oge, %84, %85 : vector<8x256xf32>
    %cst_51 = arith.constant 0.00999999977 : f32
    %87 = vector.broadcast %cst_51 : f32 to vector<8x256xf32>
    %88 = arith.mulf %87, %84 : vector<8x256xf32>
    %89 = arith.select %86, %84, %88 : vector<8x256xi1>, vector<8x256xf32>
    %c0_52 = arith.constant 0 : index
    %c0_53 = arith.constant 0 : index
    %c0_54 = arith.constant 0 : index
    %90 = vector.load %arg5[%c0_52, %c0_53, %c0_54] : memref<1x8x256xf32, #tpu.memory_space<vmem>>, vector<1x8x256xf32>
    %91 = vector.shape_cast %90 : vector<1x8x256xf32> to vector<8x256xf32>
    %92 = vector.shape_cast %89 : vector<8x256xf32> to vector<1x8x256xf32>
    tpu.vector_store %arg5[%c0_52, %c0_53, %c0_54], %92 {strides = array<i32>} : memref<1x8x256xf32, #tpu.memory_space<vmem>>, vector<1x8x256xf32>,
    return
  }
  func.func @transform_0(%arg0: i32) -> (i32, i32, i32) {
    %c0_i32 = arith.constant 0 : i32
    %c0_i32_0 = arith.constant 0 : i32
    %c0_i32_1 = arith.constant 0 : i32
    return %arg0, %c0_i32, %c0_i32_0 : i32, i32, i32
  }
  func.func @transform_1(%arg0: i32) -> (i32, i32) {
    %c0_i32 = arith.constant 0 : i32
    %c0_i32_0 = arith.constant 0 : i32
    %c0_i32_1 = arith.constant 0 : i32
    return %c0_i32, %c0_i32_0 : i32, i32
  }
  func.func @transform_2(%arg0: i32) -> (i32, i32) {
    %c0_i32 = arith.constant 0 : i32
    %c0_i32_0 = arith.constant 0 : i32
    %c0_i32_1 = arith.constant 0 : i32
    return %c0_i32, %c0_i32_0 : i32, i32
  }
  func.func @transform_3(%arg0: i32) -> (i32, i32) {
    %c0_i32 = arith.constant 0 : i32
    %c0_i32_0 = arith.constant 0 : i32
    %c0_i32_1 = arith.constant 0 : i32
    return %c0_i32, %c0_i32_0 : i32, i32
  }
  func.func @transform_4(%arg0: i32) -> (i32, i32, i32) {
    %c0_i32 = arith.constant 0 : i32
    %c0_i32_0 = arith.constant 0 : i32
    %c0_i32_1 = arith.constant 0 : i32
    return %arg0, %c0_i32, %c0_i32_0 : i32, i32, i32
  }
}

</mosaic_0001>

<llo_original>
// kernel: tpu_custom_call.1
$region0: #{tpu_custom_call.1}
  #allocation0 [shape = 'u32[]', space=smem, size = 0x4, offset = 0x4, fixed_abs, tag = 'smem constant byte address 0x4 - core index']
  #allocation1 [shape = 'u32[144,128]{1,0:T(1,128)}', space=vmem, size = 0x12000, scoped, tag = 'internal scratch']
  #allocation2 [shape = 'f32[8,256]{1,0:T(8,128)}', space=vmem, size = 0x2000, scoped, tag = 'scratch operand']
  #allocation3 [shape = 'f32[72,256]{1,0:T(8,128)}', space=vmem, size = 0x12000, scoped, tag = 'scratch operand']
  %s0 = inlined_call_operand.hbm [shape: f32[2,4,256], index: 0, kind: input, shape index: {}]
  %s1 = inlined_call_operand.vmem [shape: f32[8,72], index: 1, kind: input, shape index: {}]
  %s2 = inlined_call_operand.vmem [shape: f32[8,1], index: 2, kind: input, shape index: {}]
  %s3 = inlined_call_operand.hbm [shape: f32[9,256], index: 3, kind: input, shape index: {}]
  %s4 = inlined_call_operand.hbm [shape: f32[2,8,256], index: 4, kind: output, shape index: {}]
  %s5 = sld [smem:[#allocation0]]
  $region57: #{tpu_custom_call.1} parent=0
    _
  %s7 = ssub.s32 1, %s5
  %s8 = scalar_select 0, %s7, %s5
  $region1: #{tpu_custom_call.1} parent=0
    #allocation4 [shape = 'u8[8192]{0}', space=vmem, size = 0x2000, scoped, tag = 'input window, operand 0']
    #allocation5 [shape = 's32[2]{0}', space=sflag, size = 0x8, scoped, tag = 'scoped memory for tpu_custom_call.1']
    #allocation6 [shape = 's32[2]{0}', space=sflag, size = 0x8, scoped, tag = 'scoped memory for tpu_custom_call.1']
    #allocation7 [shape = 'u8[16384]{0}', space=vmem, size = 0x4000, scoped, tag = 'input window, operand 3, single buffered']
    #allocation8 [shape = 's32[1]{0}', space=sflag, size = 0x4, scoped, tag = 'scoped memory for tpu_custom_call.1']
    #allocation9 [shape = 'u8[16384]{0}', space=vmem, size = 0x4000, scoped, tag = 'output window, operand 0']
    %9 = vsyncpa [#allocation5], 0
    %s10 = scalar_lea.sflag [#allocation5], 1
    %11 = vsyncpa %s10, 0
    %12 = vsyncpa [#allocation8], 0
    %13 = vsyncpa [#allocation6], 0
    %s14 = scalar_lea.sflag [#allocation6], 1
    %15 = vsyncpa %s14, 0
    loop: start=0, step=1, limit=4
    $region2: #{tpu_custom_call.1} parent=1 // loop_pre_header
      _
    $region3: #{tpu_custom_call.1} parent=1 // loop_header
      %s17 = sphi 0, %s21
      %p18 = scmp.ge.s32.totalorder %s17, 4
      %s27 = sphi 0, %s29
      %s30 = sphi 0, %s27
      %s31 = sphi 0, %s30
      %s47 = sphi 0, %s31
      %s51 = sphi 0, %s51
      %s53 = sphi 0, %s51
      %s54 = sphi 0, %s53
      %s68 = sphi 0, %s54
      %s72 = sphi 0, %s72
      %s74 = sphi 0, %s72
      %s75 = sphi 0, %s74
      %s89 = sphi 0, %s75
      %s93 = sphi 0, %s93
      %s95 = sphi 0, %s93
      %s96 = sphi 0, %s95
      %s110 = sphi 0, %s96
      %s116 = sphi 0, %s118
      %s119 = sphi 0, %s116
      %s120 = sphi 0, %s119
      %s136 = sphi 0, %s120
    $region4: #{tpu_custom_call.1} parent=1 // loop_header_branch
      %20 = sbr.rel (%p18) target = $region8
    $region5: #{tpu_custom_call.1} parent=1 // loop_body
      %s22 = ssub.s32 %s17, 1
      %s23 = ssub.s32 %s17, 2
      %s24 = sadd.s32 %s17, 1
      %s25 = ssub.s32 %s17, %s24
      %p26 = scmp.eq.s32.totalorder %s25, 0
      %s28 = sadd.s32 %s27, 1
      %s29 = scalar_select %p26, %s27, %s28
      %p32 = pneg %p26
      %p33 = scmp.eq.s32.totalorder %s17, 1
      %p34 = por %p32, %p33
      %p35 = scmp.ne.s32.totalorder %s27, %s30
      %p36 = scmp.eq.s32.totalorder %s17, 0
      %p37 = por %p35, %p36
      %p38 = scmp.ne.s32.totalorder %s27, %s30
      %p39 = scmp.eq.s32.totalorder %s22, 1
      %p40 = por %p38, %p39
      %p41 = scmp.ne.s32.totalorder %s30, %s31
      %p42 = scmp.eq.s32.totalorder %s22, 0
      %p43 = por %p41, %p42
      %p44 = scmp.ne.s32.totalorder %s30, %s31
      %p45 = scmp.eq.s32.totalorder %s23, 1
      %p46 = por %p44, %p45
      %p48 = scmp.ne.s32.totalorder %s31, %s47
      %p49 = scmp.eq.s32.totalorder %s23, 0
      %p50 = por %p48, %p49
      %s52 = sadd.s32 %s51, 1
      %p55 = scmp.eq.s32.totalorder %s17, 1
      %p56 = scmp.ne.s32.totalorder %s51, %s53
      %p57 = scmp.eq.s32.totalorder %s17, 0
      %p58 = por %p56, %p57
      %p59 = scmp.ne.s32.totalorder %s51, %s53
      %p60 = scmp.eq.s32.totalorder %s22, 1
      %p61 = por %p59, %p60
      %p62 = scmp.ne.s32.totalorder %s53, %s54
      %p63 = scmp.eq.s32.totalorder %s22, 0
      %p64 = por %p62, %p63
      %p65 = scmp.ne.s32.totalorder %s53, %s54
      %p66 = scmp.eq.s32.totalorder %s23, 1
      %p67 = por %p65, %p66
      %p69 = scmp.ne.s32.totalorder %s54, %s68
      %p70 = scmp.eq.s32.totalorder %s23, 0
      %p71 = por %p69, %p70
      %s73 = sadd.s32 %s72, 1
      %p76 = scmp.eq.s32.totalorder %s17, 1
      %p77 = scmp.ne.s32.totalorder %s72, %s74
      %p78 = scmp.eq.s32.totalorder %s17, 0
      %p79 = por %p77, %p78
      %p80 = scmp.ne.s32.totalorder %s72, %s74
      %p81 = scmp.eq.s32.totalorder %s22, 1
      %p82 = por %p80, %p81
      %p83 = scmp.ne.s32.totalorder %s74, %s75
      %p84 = scmp.eq.s32.totalorder %s22, 0
      %p85 = por %p83, %p84
      %p86 = scmp.ne.s32.totalorder %s74, %s75
      %p87 = scmp.eq.s32.totalorder %s23, 1
      %p88 = por %p86, %p87
      %p90 = scmp.ne.s32.totalorder %s75, %s89
      %p91 = scmp.eq.s32.totalorder %s23, 0
      %p92 = por %p90, %p91
      %s94 = sadd.s32 %s93, 1
      %p97 = scmp.eq.s32.totalorder %s17, 1
      %p98 = scmp.ne.s32.totalorder %s93, %s95
      %p99 = scmp.eq.s32.totalorder %s17, 0
      %p100 = por %p98, %p99
      %p101 = scmp.ne.s32.totalorder %s93, %s95
      %p102 = scmp.eq.s32.totalorder %s22, 1
      %p103 = por %p101, %p102
      %p104 = scmp.ne.s32.totalorder %s95, %s96
      %p105 = scmp.eq.s32.totalorder %s22, 0
      %p106 = por %p104, %p105
      %p107 = scmp.ne.s32.totalorder %s95, %s96
      %p108 = scmp.eq.s32.totalorder %s23, 1
      %p109 = por %p107, %p108
      %p111 = scmp.ne.s32.totalorder %s96, %s110
      %p112 = scmp.eq.s32.totalorder %s23, 0
      %p113 = por %p111, %p112
      %s114 = ssub.s32 %s17, %s24
      %p115 = scmp.eq.s32.totalorder %s114, 0
      %s117 = sadd.s32 %s116, 1
      %s118 = scalar_select %p115, %s116, %s117
      %p121 = pneg %p115
      %p122 = scmp.eq.s32.totalorder %s17, 1
      %p123 = por %p121, %p122
      %p124 = scmp.ne.s32.totalorder %s116, %s119
      %p125 = scmp.eq.s32.totalorder %s17, 0
      %p126 = por %p124, %p125
      %p127 = scmp.ne.s32.totalorder %s116, %s119
      %p128 = scmp.eq.s32.totalorder %s22, 1
      %p129 = por %p127, %p128
      %p130 = scmp.ne.s32.totalorder %s119, %s120
      %p131 = scmp.eq.s32.totalorder %s22, 0
      %p132 = por %p130, %p131
      %p133 = scmp.ne.s32.totalorder %s119, %s120
      %p134 = scmp.eq.s32.totalorder %s23, 1
      %p135 = por %p133, %p134
      %p137 = scmp.ne.s32.totalorder %s120, %s136
      %p138 = scmp.eq.s32.totalorder %s23, 0
      %p139 = por %p137, %p138
      %p140 = scmp.le.s32.totalorder 1, %s17
      %p141 = scmp.lt.s32.totalorder %s17, 3
      %p142 = pnand %p140, %p141
      %p143 = pneg %p142
      // Predicated region
      $region9: #{tpu_custom_call.1} parent=5 // pred_check
        _
      $region10: #{tpu_custom_call.1} parent=5 // pred_check_branch
        %145 = sbr.rel (%p142) target = $region12
      $region11: #{tpu_custom_call.1} parent=5 // pred_region
        %s146 = ssub.s32 %s17, 1
        // Predicated region
        $region13: #{tpu_custom_call.1} parent=11 // pred_check
          %p147 = pneg %p64
        $region14: #{tpu_custom_call.1} parent=11 // pred_check_branch
          %149 = sbr.rel (%p147) target = $region16
        $region15: #{tpu_custom_call.1} parent=11 // pred_region
          _
        $region16: #{tpu_custom_call.1} parent=11 // pred_fallthru
          _
        // Predicated region
        $region17: #{tpu_custom_call.1} parent=11 // pred_check
          %p150 = pneg %p85
        $region18: #{tpu_custom_call.1} parent=11 // pred_check_branch
          %152 = sbr.rel (%p150) target = $region20
        $region19: #{tpu_custom_call.1} parent=11 // pred_region
          _
        $region20: #{tpu_custom_call.1} parent=11 // pred_fallthru
          _
        // Predicated region
        $region21: #{tpu_custom_call.1} parent=11 // pred_check
          %p153 = pneg %p106
        $region22: #{tpu_custom_call.1} parent=11 // pred_check_branch
          %155 = sbr.rel (%p153) target = $region24
        $region23: #{tpu_custom_call.1} parent=11 // pred_region
          %s157 = ssub.s32 512, 512
          %158 = vsyncadd [#allocation8], %s157
          %s159 = sshll.u32 [#allocation7], 4
          %s160 = int_to_ptr.vmem [resolvable:$true] %s159
          %165 = dma.hbm_to_vmem [thread:$0]  %s3, 512, %s160, [#allocation8], 256, 256, 16
        $region24: #{tpu_custom_call.1} parent=11 // pred_fallthru
          _
      $region12: #{tpu_custom_call.1} parent=5 // pred_fallthru
        _
      %p166 = scmp.lt.s32.totalorder %s17, 2
      // Predicated region
      $region25: #{tpu_custom_call.1} parent=5 // pred_check
        %p167 = pneg %p166
      $region26: #{tpu_custom_call.1} parent=5 // pred_check_branch
        %169 = sbr.rel (%p167) target = $region28
      $region27: #{tpu_custom_call.1} parent=5 // pred_region
        // Predicated region
        $region29: #{tpu_custom_call.1} parent=27 // pred_check
          %p170 = pneg %p37
        $region30: #{tpu_custom_call.1} parent=27 // pred_check_branch
          %172 = sbr.rel (%p170) target = $region32
        $region31: #{tpu_custom_call.1} parent=27 // pred_region
          %s173 = sand.u32 %s27, 1
          %s174 = scalar_lea.sflag [#allocation5], %s173
          %s175 = sand.u32 %s27, 1
          %s176 = smul.addr %s175, 8
          %s177 = scalar_lea.vmem [#allocation4], %s176
          %s179 = ssub.s32 128, 128
          %180 = vsyncadd %s174, %s179
          %s181 = smul.addr %s17, 2
          %s182 = smul.addr %s181, 64
          %s183 = scalar_lea.hbm %s0, %s182
          %s185 = sshll.u32 %s177, 4
          %s186 = int_to_ptr.vmem [resolvable:$true] %s185
          %188 = dma.hbm_to_vmem [thread:$0]  %s183, 128, %s186, %s174
        $region32: #{tpu_custom_call.1} parent=27 // pred_fallthru
          _
      $region28: #{tpu_custom_call.1} parent=5 // pred_fallthru
        _
      %p189 = scmp.le.s32.totalorder 1, %s17
      %p190 = scmp.lt.s32.totalorder %s17, 3
      %p191 = pnand %p189, %p190
      %p192 = pneg %p191
      // Predicated region
      $region33: #{tpu_custom_call.1} parent=5 // pred_check
        _
      $region34: #{tpu_custom_call.1} parent=5 // pred_check_branch
        %194 = sbr.rel (%p191) target = $region36
      $region35: #{tpu_custom_call.1} parent=5 // pred_region
        %s195 = ssub.s32 %s17, 1
        %s196 = sand.u32 %s30, 1
        %s197 = scalar_lea.sflag [#allocation5], %s196
        %s198 = sand.u32 %s30, 1
        %s199 = smul.addr %s198, 8
        %s200 = scalar_lea.vmem [#allocation4], %s199
        // Predicated region
        $region37: #{tpu_custom_call.1} parent=35 // pred_check
          %p201 = pneg %p43
        $region38: #{tpu_custom_call.1} parent=35 // pred_check_branch
          %203 = sbr.rel (%p201) target = $region40
        $region39: #{tpu_custom_call.1} parent=35 // pred_region
          %204 = dma.done %s197, 128
        $region40: #{tpu_custom_call.1} parent=35 // pred_fallthru
          _
        // Predicated region
        $region41: #{tpu_custom_call.1} parent=35 // pred_check
          %p205 = pneg %p106
        $region42: #{tpu_custom_call.1} parent=35 // pred_check_branch
          %207 = sbr.rel (%p205) target = $region44
        $region43: #{tpu_custom_call.1} parent=35 // pred_region
          %208 = dma.done [#allocation8], 512
        $region44: #{tpu_custom_call.1} parent=35 // pred_fallthru
          _
        %s209 = sand.u32 %s30, 1
        %s210 = scalar_lea.sflag [#allocation5], %s209
        %s211 = sand.u32 %s30, 1
        %s212 = smul.addr %s211, 8
        %s213 = scalar_lea.vmem [#allocation4], %s212
        %p214 = pneg %p43
        %p215 = pneg %p40
        %p216 = pneg %p64
        %p217 = pneg %p61
        %p218 = pneg %p85
        %p219 = pneg %p82
        %p220 = pneg %p106
        %p221 = pneg %p103
        %p222 = pneg %p132
        %p223 = pneg %p129
        %s224 = sand.u32 %s119, 1
        %s225 = scalar_lea.sflag [#allocation6], %s224
        %s226 = sand.u32 %s119, 1
        %s227 = smul.addr %s226, 16
        %s228 = scalar_lea.vmem [#allocation9], %s227
        %229 = vst [vmem:[#allocation2] sm:$0xf0] 0.0
        %230 = vst [vmem:[#allocation2 + $0x8] sm:$0xf0] 0.0
        %v231 = vld [vmem:[%s200] sm:$0xff]
        %v233 = vcombine.high %v231, %v231
        %235 = vst [vmem:[#allocation2] sm:$0xf] %v231
        %236 = vst [vmem:[#allocation2 + $0x8] sm:$0xf] %v233
        %v237 = vld [vmem:[#allocation2] sm:$0xff]
        %v238 = vld [vmem:[#allocation2 + $0x8] sm:$0xff]
        %239 = vrot.lane.b32.xlu0 %v237, 17
        %v240 = vpop.permute.xlu0 %239
        %241 = vrot.lane.b32.xlu0 %v238, 17
        %v242 = vpop.permute.xlu0 %241
        %v243 = vlaneseq
        %v244 = vand.u32 %v243, 127
        %vm245 = vcmp.lt.s32.totalorder %v244, 17
        %v246 = vsel %vm245, %v240, %v242
        %v247 = vsel %vm245, %v242, %v240
        %v248 = vld [vmem:[#allocation7] ss:$8 sm:$0x3]
        %vm249 = vcmp.ne.f32.partialorder %v248, 0.0
        %v250 = vsel %vm249, 1, 0
        %v251 = vlaneseq
        %v252 = vshrl.u32 %v251, 7
        %v253 = vsub.s32 0, %v252
        %v254 = vrot.slane %v250, %v253
        %v255 = vlaneseq
        %v256 = vshrl.u32 %v255, 7
        %v257 = vsub.s32 1, %v256
        %v258 = vrot.slane %v250, %v257
        %vm259 = vcmp.eq.s32.totalorder %v254, 1
        %vm260 = vcmp.eq.s32.totalorder %v258, 1
        %v261 = vsel %vm259, %v247, 0.0
        %v262 = vsel %vm260, %v246, 0.0
        %263 = vst [vmem:[#allocation3] sm:$0xff] %v261
        %264 = vst [vmem:[#allocation3 + $0x8] sm:$0xff] %v262
        %265 = vrot.lane.b32.xlu0 %v237, 16
        %v266 = vpop.permute.xlu0 %265
        %267 = vrot.lane.b32.xlu0 %v238, 16
        %v268 = vpop.permute.xlu0 %267
        %vm269 = vcmp.lt.s32.totalorder %v244, 16
        %v270 = vsel %vm269, %v266, %v268
        %v271 = vsel %vm269, %v268, %v266
        %s272 = scalar_lea.vmem [#allocation7], 1
        %v273 = vld [vmem:[%s272] ss:$8 sm:$0x3]
        %vm274 = vcmp.ne.f32.partialorder %v273, 0.0
        %v275 = vsel %vm274, 1, 0
        %v276 = vlaneseq
        %v277 = vshrl.u32 %v276, 7
        %v278 = vsub.s32 0, %v277
        %v279 = vrot.slane %v275, %v278
        %v280 = vlaneseq
        %v281 = vshrl.u32 %v280, 7
        %v282 = vsub.s32 1, %v281
        %v283 = vrot.slane %v275, %v282
        %vm284 = vcmp.eq.s32.totalorder %v279, 1
        %vm285 = vcmp.eq.s32.totalorder %v283, 1
        %v286 = vsel %vm284, %v271, 0.0
        %v287 = vsel %vm285, %v270, 0.0
        %288 = vst [vmem:[#allocation3 + $0x10] sm:$0xff] %v286
        %289 = vst [vmem:[#allocation3 + $0x18] sm:$0xff] %v287
        %290 = vrot.lane.b32.xlu0 %v237, 15
        %v291 = vpop.permute.xlu0 %290
        %292 = vrot.lane.b32.xlu0 %v238, 15
        %v293 = vpop.permute.xlu0 %292
        %vm294 = vcmp.lt.s32.totalorder %v244, 15
        %v295 = vsel %vm294, %v291, %v293
        %v296 = vsel %vm294, %v293, %v291
        %s297 = scalar_lea.vmem [#allocation7], 2
        %v298 = vld [vmem:[%s297] ss:$8 sm:$0x3]
        %vm299 = vcmp.ne.f32.partialorder %v298, 0.0
        %v300 = vsel %vm299, 1, 0
        %v301 = vlaneseq
        %v302 = vshrl.u32 %v301, 7
        %v303 = vsub.s32 0, %v302
        %v304 = vrot.slane %v300, %v303
        %v305 = vlaneseq
        %v306 = vshrl.u32 %v305, 7
        %v307 = vsub.s32 1, %v306
        %v308 = vrot.slane %v300, %v307
        %vm309 = vcmp.eq.s32.totalorder %v304, 1
        %vm310 = vcmp.eq.s32.totalorder %v308, 1
        %v311 = vsel %vm309, %v296, 0.0
        %v312 = vsel %vm310, %v295, 0.0
        %313 = vst [vmem:[#allocation3 + $0x20] sm:$0xff] %v311
        %314 = vst [vmem:[#allocation3 + $0x28] sm:$0xff] %v312
        %315 = vrot.lane.b32.xlu0 %v237, 1
        %v316 = vpop.permute.xlu0 %315
        %317 = vrot.lane.b32.xlu0 %v238, 1
        %v318 = vpop.permute.xlu0 %317
        %vm319 = vcmp.lt.s32.totalorder %v244, 1
        %v320 = vsel %vm319, %v316, %v318
        %v321 = vsel %vm319, %v318, %v316
        %s322 = scalar_lea.vmem [#allocation7], 3
        %v323 = vld [vmem:[%s322] ss:$8 sm:$0x3]
        %vm324 = vcmp.ne.f32.partialorder %v323, 0.0
        %v325 = vsel %vm324, 1, 0
        %v326 = vlaneseq
        %v327 = vshrl.u32 %v326, 7
        %v328 = vsub.s32 0, %v327
        %v329 = vrot.slane %v325, %v328
        %v330 = vlaneseq
        %v331 = vshrl.u32 %v330, 7
        %v332 = vsub.s32 1, %v331
        %v333 = vrot.slane %v325, %v332
        %vm334 = vcmp.eq.s32.totalorder %v329, 1
        %vm335 = vcmp.eq.s32.totalorder %v333, 1
        %v336 = vsel %vm334, %v321, 0.0
        %v337 = vsel %vm335, %v320, 0.0
        %338 = vst [vmem:[#allocation3 + $0x30] sm:$0xff] %v336
        %339 = vst [vmem:[#allocation3 + $0x38] sm:$0xff] %v337
        %340 = vst [vmem:[#allocation3 + $0x40] sm:$0xff] %v237
        %341 = vst [vmem:[#allocation3 + $0x48] sm:$0xff] %v238
        %342 = vrot.lane.b32.xlu0 %v237, 127
        %v343 = vpop.permute.xlu0 %342
        %344 = vrot.lane.b32.xlu0 %v238, 127
        %v345 = vpop.permute.xlu0 %344
        %vm346 = vcmp.lt.s32.totalorder %v244, 127
        %v347 = vsel %vm346, %v343, %v345
        %v348 = vsel %vm346, %v345, %v343
        %s349 = scalar_lea.vmem [#allocation7], 5
        %v350 = vld [vmem:[%s349] ss:$8 sm:$0x3]
        %vm351 = vcmp.ne.f32.partialorder %v350, 0.0
        %v352 = vsel %vm351, 1, 0
        %v353 = vlaneseq
        %v354 = vshrl.u32 %v353, 7
        %v355 = vsub.s32 0, %v354
        %v356 = vrot.slane %v352, %v355
        %v357 = vlaneseq
        %v358 = vshrl.u32 %v357, 7
        %v359 = vsub.s32 1, %v358
        %v360 = vrot.slane %v352, %v359
        %vm361 = vcmp.eq.s32.totalorder %v356, 1
        %vm362 = vcmp.eq.s32.totalorder %v360, 1
        %v363 = vsel %vm361, %v347, 0.0
        %v364 = vsel %vm362, %v348, 0.0
        %365 = vst [vmem:[#allocation3 + $0x50] sm:$0xff] %v363
        %366 = vst [vmem:[#allocation3 + $0x58] sm:$0xff] %v364
        %367 = vrot.lane.b32.xlu0 %v237, 113
        %v368 = vpop.permute.xlu0 %367
        %369 = vrot.lane.b32.xlu0 %v238, 113
        %v370 = vpop.permute.xlu0 %369
        %vm371 = vcmp.lt.s32.totalorder %v244, 113
        %v372 = vsel %vm371, %v368, %v370
        %v373 = vsel %vm371, %v370, %v368
        %s374 = scalar_lea.vmem [#allocation7], 6
        %v375 = vld [vmem:[%s374] ss:$8 sm:$0x3]
        %vm376 = vcmp.ne.f32.partialorder %v375, 0.0
        %v377 = vsel %vm376, 1, 0
        %v378 = vlaneseq
        %v379 = vshrl.u32 %v378, 7
        %v380 = vsub.s32 0, %v379
        %v381 = vrot.slane %v377, %v380
        %v382 = vlaneseq
        %v383 = vshrl.u32 %v382, 7
        %v384 = vsub.s32 1, %v383
        %v385 = vrot.slane %v377, %v384
        %vm386 = vcmp.eq.s32.totalorder %v381, 1
        %vm387 = vcmp.eq.s32.totalorder %v385, 1
        %v388 = vsel %vm386, %v372, 0.0
        %v389 = vsel %vm387, %v373, 0.0
        %390 = vst [vmem:[#allocation3 + $0x60] sm:$0xff] %v388
        %391 = vst [vmem:[#allocation3 + $0x68] sm:$0xff] %v389
        %392 = vrot.lane.b32.xlu0 %v237, 112
        %v393 = vpop.permute.xlu0 %392
        %394 = vrot.lane.b32.xlu0 %v238, 112
        %v395 = vpop.permute.xlu0 %394
        %vm396 = vcmp.lt.s32.totalorder %v244, 112
        %v397 = vsel %vm396, %v393, %v395
        %v398 = vsel %vm396, %v395, %v393
        %s399 = scalar_lea.vmem [#allocation7], 7
        %v400 = vld [vmem:[%s399] ss:$8 sm:$0x3]
        %vm401 = vcmp.ne.f32.partialorder %v400, 0.0
        %v402 = vsel %vm401, 1, 0
        %v403 = vlaneseq
        %v404 = vshrl.u32 %v403, 7
        %v405 = vsub.s32 0, %v404
        %v406 = vrot.slane %v402, %v405
        %v407 = vlaneseq
        %v408 = vshrl.u32 %v407, 7
        %v409 = vsub.s32 1, %v408
        %v410 = vrot.slane %v402, %v409
        %vm411 = vcmp.eq.s32.totalorder %v406, 1
        %vm412 = vcmp.eq.s32.totalorder %v410, 1
        %v413 = vsel %vm411, %v397, 0.0
        %v414 = vsel %vm412, %v398, 0.0
        %415 = vst [vmem:[#allocation3 + $0x70] sm:$0xff] %v413
        %416 = vst [vmem:[#allocation3 + $0x78] sm:$0xff] %v414
        %417 = vrot.lane.b32.xlu0 %v237, 111
        %v418 = vpop.permute.xlu0 %417
        %419 = vrot.lane.b32.xlu0 %v238, 111
        %v420 = vpop.permute.xlu0 %419
        %vm421 = vcmp.lt.s32.totalorder %v244, 111
        %v422 = vsel %vm421, %v418, %v420
        %v423 = vsel %vm421, %v420, %v418
        %s424 = scalar_lea.vmem [#allocation7], 16
        %v425 = vld [vmem:[%s424] ss:$8 sm:$0x3]
        %vm426 = vcmp.ne.f32.partialorder %v425, 0.0
        %v427 = vsel %vm426, 1, 0
        %v428 = vlaneseq
        %v429 = vshrl.u32 %v428, 7
        %v430 = vsub.s32 0, %v429
        %v431 = vrot.slane %v427, %v430
        %v432 = vlaneseq
        %v433 = vshrl.u32 %v432, 7
        %v434 = vsub.s32 1, %v433
        %v435 = vrot.slane %v427, %v434
        %vm436 = vcmp.eq.s32.totalorder %v431, 1
        %vm437 = vcmp.eq.s32.totalorder %v435, 1
        %v438 = vsel %vm436, %v422, 0.0
        %v439 = vsel %vm437, %v423, 0.0
        %440 = vst [vmem:[#allocation3 + $0x80] sm:$0xff] %v438
        %441 = vst [vmem:[#allocation3 + $0x88] sm:$0xff] %v439
        %v442 = vld [vmem:[%s1] sm:$0xff]
        %v443 = vld [vmem:[#allocation3] sm:$0xff]
        %v444 = vld [vmem:[#allocation3 + $0x8] sm:$0xff]
        %v445 = vld [vmem:[#allocation3 + $0x10] sm:$0xff]
        %v446 = vld [vmem:[#allocation3 + $0x18] sm:$0xff]
        %v447 = vld [vmem:[#allocation3 + $0x20] sm:$0xff]
        %v448 = vld [vmem:[#allocation3 + $0x28] sm:$0xff]
        %v449 = vld [vmem:[#allocation3 + $0x30] sm:$0xff]
        %v450 = vld [vmem:[#allocation3 + $0x38] sm:$0xff]
        %v451 = vld [vmem:[#allocation3 + $0x40] sm:$0xff]
        %v452 = vld [vmem:[#allocation3 + $0x48] sm:$0xff]
        %v453 = vld [vmem:[#allocation3 + $0x50] sm:$0xff]
        %v454 = vld [vmem:[#allocation3 + $0x58] sm:$0xff]
        %v455 = vld [vmem:[#allocation3 + $0x60] sm:$0xff]
        %v456 = vld [vmem:[#allocation3 + $0x68] sm:$0xff]
        %v457 = vld [vmem:[#allocation3 + $0x70] sm:$0xff]
        %v458 = vld [vmem:[#allocation3 + $0x78] sm:$0xff]
        %v459 = vld [vmem:[#allocation3 + $0x80] sm:$0xff]
        %v460 = vld [vmem:[#allocation3 + $0x88] sm:$0xff]
        %v461 = vld [vmem:[%s2] sm:$0xff]
        %463 = vset.pattern.permute.xlu0 0
        %464 = vperm.xlu0 %463, %v461
        %v465 = vpop.permute.xlu0 %464
        %vm467 = vcmask 588800
        %v469 = vsel %vm467, %v442, 0
        %471 = vmatprep.subr.mxu0 %v444
        %472 = vmatpush1.msra.mxu0 %v443
        %473 = vmatprep.subr.mxu0 %v446
        %474 = vmatpush1.msra.mxu0 %v445
        %475 = vmatprep.subr.mxu0 %v448
        %476 = vmatpush1.msra.mxu0 %v447
        %477 = vmatprep.subr.mxu0 %v450
        %478 = vmatpush1.msra.mxu0 %v449
        %479 = vmatprep.subr.mxu0 %v452
        %480 = vmatpush1.msra.mxu0 %v451
        %481 = vmatprep.subr.mxu0 %v454
        %482 = vmatpush1.msra.mxu0 %v453
        %483 = vmatprep.subr.mxu0 %v456
        %484 = vmatpush1.msra.mxu0 %v455
        %485 = vmatprep.subr.mxu0 %v458
        %486 = vmatpush1.msra.mxu0 %v457
        %487 = vmatprep.subr.mxu0 %v460
        %488 = vmatpush1.msra.mxu0 %v459
        %489 = vmatprep.subr.mxu0 0.0
        %490 = vmatpush1.msra.mxu0 0.0
        %491 = vmatprep.subr.mxu0 0.0
        %492 = vmatpush1.msra.mxu0 0.0
        %493 = vmatprep.subr.mxu0 0.0
        %494 = vmatpush1.msra.mxu0 0.0
        %495 = vmatprep.subr.mxu0 0.0
        %496 = vmatpush1.msra.mxu0 0.0
        %497 = vmatprep.subr.mxu0 0.0
        %498 = vmatpush1.msra.mxu0 0.0
        %499 = vmatprep.subr.mxu0 0.0
        %500 = vmatpush1.msra.mxu0 0.0
        %501 = vmatprep.subr.mxu0 0.0
        %502 = vmatpush1.msra.mxu0 0.0
        %503 = vmatprep.subr.mxu0 0.0
        %504 = vmatpush1.msra.mxu0 0.0
        %505 = vmatprep.subr.mxu0 0.0
        %506 = vmatpush1.msra.mxu0 0.0
        %507 = vmatprep.subr.mxu0 0.0
        %508 = vmatpush1.msra.mxu0 0.0
        %509 = vmatprep.subr.mxu0 0.0
        %510 = vmatpush1.msra.mxu0 0.0
        %511 = vmatprep.subr.mxu0 0.0
        %512 = vmatpush1.msra.mxu0 0.0
        %513 = vmatprep.subr.mxu0 0.0
        %514 = vmatpush1.msra.mxu0 0.0
        %515 = vmatprep.subr.mxu0 0.0
        %516 = vmatpush1.msra.mxu0 0.0
        %517 = vmatprep.subr.mxu0 0.0
        %518 = vmatpush1.msra.mxu0 0.0
        %519 = vmatprep.subr.mxu0 0.0
        %520 = vmatpush1.msra.mxu0 0.0
        %521 = vmatprep.subr.mxu0 0.0
        %522 = vmatpush1.msra.mxu0 0.0
        %523 = vmatprep.subr.mxu0 0.0
        %524 = vmatpush1.msra.mxu0 0.0
        %525 = vmatprep.subr.mxu0 0.0
        %526 = vmatpush1.msra.mxu0 0.0
        %527 = vmatprep.subr.mxu0 0.0
        %528 = vmatpush1.msra.mxu0 0.0
        %529 = vmatprep.subr.mxu0 0.0
        %530 = vmatpush1.msra.mxu0 0.0
        %531 = vmatprep.subr.mxu0 0.0
        %532 = vmatpush1.msra.mxu0 0.0
        %533 = vmatprep.subr.mxu0 0.0
        %534 = vmatpush1.msra.mxu0 0.0
        %535 = vmatprep.mubr.f32.mxu0 0.0
        %536 = vmatmul.mubr.f32.gmra.mrb[0].mxu0 %v469
        %v537 = vpop.f32.mrb[0].mxu0
        %v538 = vadd.f32 %v465, %v537
        %v539 = vpop.f32.mrb[0].mxu0
        %v540 = vadd.f32 %v465, %v539
        %541 = vdwg.mxu0
        %vm542 = vcmp.ge.f32.partialorder %v538, 0.0
        %vm543 = vcmp.ge.f32.partialorder %v540, 0.0
        %v544 = vmul.f32 %v538, 0.01
        %v545 = vmul.f32 %v540, 0.01
        %v546 = vsel %vm542, %v538, %v544
        %v547 = vsel %vm543, %v540, %v545
        %548 = vst [vmem:[%s228] sm:$0xff] %v546
        %549 = vst [vmem:[%s228 + $0x8] sm:$0xff] %v547
        %s550 = sand.u32 %s119, 1
        %s551 = scalar_lea.sflag [#allocation6], %s550
        %s552 = sand.u32 %s119, 1
        %s553 = smul.addr %s552, 16
        %s554 = scalar_lea.vmem [#allocation9], %s553
        // Predicated region
        $region45: #{tpu_custom_call.1} parent=35 // pred_check
          %p555 = pneg %p129
        $region46: #{tpu_custom_call.1} parent=35 // pred_check_branch
          %557 = sbr.rel (%p555) target = $region48
        $region47: #{tpu_custom_call.1} parent=35 // pred_region
          %s559 = ssub.s32 256, 256
          %560 = vsyncadd %s551, %s559
          %s561 = smul.addr %s22, 2
          %s562 = smul.addr %s561, 128
          %s563 = scalar_lea.hbm %s4, %s562
          %s565 = sshll.u32 %s554, 4
          %s566 = int_to_ptr.vmem [resolvable:$true] %s565
          %568 = dma.vmem_to_hbm [thread:$0]  %s566, 256, %s563, %s551
        $region48: #{tpu_custom_call.1} parent=35 // pred_fallthru
          _
      $region36: #{tpu_custom_call.1} parent=5 // pred_fallthru
        _
      %p569 = scmp.le.s32.totalorder 2, %s17
      // Predicated region
      $region49: #{tpu_custom_call.1} parent=5 // pred_check
        %p570 = pneg %p569
      $region50: #{tpu_custom_call.1} parent=5 // pred_check_branch
        %572 = sbr.rel (%p570) target = $region52
      $region51: #{tpu_custom_call.1} parent=5 // pred_region
        %s573 = ssub.s32 %s17, 2
        // Predicated region
        $region53: #{tpu_custom_call.1} parent=51 // pred_check
          %p574 = pneg %p135
        $region54: #{tpu_custom_call.1} parent=51 // pred_check_branch
          %576 = sbr.rel (%p574) target = $region56
        $region55: #{tpu_custom_call.1} parent=51 // pred_region
          %s577 = sand.u32 %s120, 1
          %s578 = scalar_lea.sflag [#allocation6], %s577
          %s579 = sand.u32 %s120, 1
          %s580 = smul.addr %s579, 16
          %s581 = scalar_lea.vmem [#allocation9], %s580
          %582 = dma.done %s578, 256
        $region56: #{tpu_custom_call.1} parent=51 // pred_fallthru
          _
      $region52: #{tpu_custom_call.1} parent=5 // pred_fallthru
        _
    $region6: #{tpu_custom_call.1} parent=1 // loop_footer
      %s21 = sadd.s32 1, %s17
    $region7: #{tpu_custom_call.1} parent=1 // loop_footer_branch
      %16 = sbr.rel target = $region3
    $region8: #{tpu_custom_call.1} parent=1 // loop_exit
      _
    %583 = vsyncpa [#allocation5], 1
    %s584 = scalar_lea.sflag [#allocation5], 1
    %585 = vsyncpa %s584, 1
    %586 = vsyncpa [#allocation8], 1
    %587 = vsyncpa [#allocation6], 1
    %s588 = scalar_lea.sflag [#allocation6], 1
    %589 = vsyncpa %s588, 1

</llo_original>
